<compile_context>
chip_gen: v7x
topology: tpu7x:2x2x1
jax: 0.10.0
libtpu: 0.0.40
codegen_flags: <defaults>
</compile_context>

<pallas_src>
import functools
import math

import jax
import jax.numpy as jnp
from jax import lax
from jax.experimental import pallas as pl
from jax.experimental.pallas import tpu as pltpu


# Hash constants as plain Python ints (int32 range) -> inlined literals, never
# captured as jaxpr consts.
_C1 = 0x7FEB352D                      #  2146317357
_C2 = 0x846CA68B - (1 << 32)          # -2073123189
_GOLDEN = 0x9E3779B9 - (1 << 32)      # -1640531527


def _round_up(a, b):
    return (a + b - 1) // b * b


def _vmem_budget_and_limit():
    """Per-generation VMEM pipeline budget + scoped-vmem limit."""
    cap = 64 * 1024 * 1024            # conservative default (v7x per-TC)
    try:
        info = pltpu.get_tpu_info()
        cap = int(getattr(info, "vmem_capacity_bytes", cap)) or cap
    except Exception:
        pass
    limit = min((cap * 3) // 4, 96 * 1024 * 1024)   # 48 MiB on v7x, 96 MiB on v5e/v6e
    budget = limit // 2                              # headroom for intermediates
    return budget, limit


def _pick_row_tile(rows, lane, itemsize, budget, max_tile):
    """Rows per grid step: as big as the budget allows, >=2 steps when possible."""
    # 2x double-buffered input + output tiles + ~f32 intermediates (bits / mult).
    per_row = lane * (4 * itemsize + 8)
    tile = max(8, budget // max(per_row, 1))
    tile = min(tile, max_tile)
    if rows >= 16:
        tile = min(tile, rows // 2)    # >=2 grid steps -> both TCs on v7x megacore
    tile = max(8, (tile // 8) * 8)
    if tile >= rows:
        return rows                    # single full block (legal even if rows % 8 != 0)
    return tile


def _rand_bits24(idx, seed_mixed):
    """Counter hash (lowbias32 finalizer) -> 24 uniform bits, int32-only ops.

    Logical right shifts emulated as (arith shift & mask) so everything stays in
    signed int32 land (Mosaic + interpret mode).
    """
    x = idx ^ seed_mixed
    x = (x ^ ((x >> 16) & 0xFFFF)) * _C1
    x = (x ^ ((x >> 15) & 0x1FFFF)) * _C2
    x = x ^ ((x >> 16) & 0xFFFF)
    return (x >> 8) & 0xFFFFFF        # in [0, 2^24)


def _dropout_kernel(p_ref, seed_ref, x_ref, o_ref, *, channelwise):
    """One (rows, cols) VMEM tile of dropout.

    p_ref, seed_ref : SMEM scalars (shape (1,))
    x_ref, o_ref    : VMEM tiles; lanes (cols) always cover the full lane dim.
    """
    rows, cols = x_ref.shape

    # Scalar setup (SMEM / scalar core, negligible).
    p = jnp.clip(p_ref[0], 0.0, 1.0)
    thr = (p * 16777216.0).astype(jnp.int32)            # floor(p * 2^24)
    scale = jnp.where(p < 1.0, 1.0 / (1.0 - p), 0.0)    # p==1 -> all zeros
    seed_mixed = seed_ref[0] * _GOLDEN
    base_row = pl.program_id(0) * rows                   # global row offset

    xv = x_ref[...]
    scale_x = scale.astype(xv.dtype)                     # single scalar cast

    if channelwise:
        # dropout2d: one draw per (n, c) row -> (rows, 1) multiplier broadcast over lanes.
        ridx = base_row + lax.broadcasted_iota(jnp.int32, (rows, 1), 0)
        bits = _rand_bits24(ridx, seed_mixed)
    else:
        # dropout: one draw per element; counter = global flattened index.
        local = (lax.broadcasted_iota(jnp.int32, (rows, cols), 0) * cols
                 + lax.broadcasted_iota(jnp.int32, (rows, cols), 1))
        bits = _rand_bits24(base_row * cols + local, seed_mixed)

    mult = jnp.where(bits >= thr, scale_x, 0.0)          # P(keep) = 1 - p, in x dtype
    o_ref[...] = xv * mult


def _channel_mult_kernel(p_ref, seed_ref, o_ref):
    """Tiny lane-dense kernel: per-channel multiplier, channels mapped to lanes."""
    p = jnp.clip(p_ref[0], 0.0, 1.0)
    thr = (p * 16777216.0).astype(jnp.int32)
    scale = jnp.where(p < 1.0, 1.0 / (1.0 - p), 0.0)
    seed_mixed = seed_ref[0] * _GOLDEN
    r, c = o_ref.shape
    cidx = lax.broadcasted_iota(jnp.int32, (r, c), 1)    # lane index = channel id
    bits = _rand_bits24(cidx, seed_mixed)
    o_ref[...] = jnp.where(bits >= thr, scale, 0.0)


def _run_dropout(x2, p, seed_arr, row_tile, channelwise, vmem_limit):
    rows, cols = x2.shape
    kernel = functools.partial(_dropout_kernel, channelwise=channelwise)
    return pl.pallas_call(
        kernel,
        out_shape=jax.ShapeDtypeStruct(x2.shape, x2.dtype),
        grid=(pl.cdiv(rows, row_tile),),                 # partial last block is masked
        in_specs=[
            pl.BlockSpec(memory_space=pltpu.MemorySpace.SMEM),    # p
            pl.BlockSpec(memory_space=pltpu.MemorySpace.SMEM),    # seed
            pl.BlockSpec((row_tile, cols), lambda i: (i, 0)),     # x row-tile
        ],
        out_specs=pl.BlockSpec((row_tile, cols), lambda i: (i, 0)),
        compiler_params=pltpu.CompilerParams(
            dimension_semantics=("parallel",),           # 2 TCs on v7x
            vmem_limit_bytes=vmem_limit,
        ),
    )(p, seed_arr, x2)


def _run_channel_mult(p, seed_arr, rp, vmem_limit):
    return pl.pallas_call(
        _channel_mult_kernel,
        out_shape=jax.ShapeDtypeStruct((1, rp), jnp.float32),
        grid=(1,),
        in_specs=[
            pl.BlockSpec(memory_space=pltpu.MemorySpace.SMEM),
            pl.BlockSpec(memory_space=pltpu.MemorySpace.SMEM),
        ],
        out_specs=pl.BlockSpec((1, rp), lambda i: (0, 0)),
        compiler_params=pltpu.CompilerParams(vmem_limit_bytes=vmem_limit),
    )(p, seed_arr)


def dynamic_dropout(x, p_storage, seed, *, dropout_dim="1d", training=True):
    """JAX/Pallas equivalent of DynamicDropout.forward."""
    assert dropout_dim in ("1d", "2d"), "Only 1d or 2d dropout is supported"
    if not training:
        return x

    p = jnp.asarray(p_storage, jnp.float32).reshape(-1)[:1]      # p_storage[0]
    seed_arr = jnp.asarray([seed], jnp.int32)
    itemsize = jnp.dtype(x.dtype).itemsize
    budget, vmem_limit = _vmem_budget_and_limit()

    if dropout_dim == "2d":
        assert x.ndim >= 2, "dropout2d needs at least (N, C) dims"
        N, C = x.shape[0], x.shape[1]
        R = N * C
        HW = math.prod(x.shape[2:]) if x.ndim > 2 else 1

        if HW >= 128 and HW % 128 == 0:
            # Lane-dense channel rows: one draw per row, full-lane stores, no pad.
            x2 = x.reshape(R, HW)
            row_tile = _pick_row_tile(R, HW, itemsize, budget, max_tile=2048)
            out2 = _run_dropout(x2, p, seed_arr, row_tile, True, vmem_limit)
            return out2.reshape(x.shape)

        # Narrow / non-128-multiple spatial dims: compute only the (R,) per-channel
        # multiplier lane-dense in Pallas, and let XLA do the fused broadcast
        # multiply (HBM roofline, no masked vst).
        rp = _round_up(max(R, 1), 128)
        m = _run_channel_mult(p, seed_arr, rp, vmem_limit)       # (1, rp) f32
        m = m[0, :R].astype(x.dtype).reshape((N, C) + (1,) * (x.ndim - 2))
        return x * m

    # '1d': per-element dropout on a lane-dense (rows, lane) slab.  Pick the
    # largest lane width that divides x.size so the reshape is free (no pad).
    total = x.size
    lane = 0
    for cand in (1024, 512, 256, 128):
        if total % cand == 0:
            lane = cand
            break

    if lane:
        rows = total // lane
        x2 = x.reshape(rows, lane)
        row_tile = _pick_row_tile(rows, lane, itemsize, budget, max_tile=1024)
        out2 = _run_dropout(x2, p, seed_arr, row_tile, False, vmem_limit)
        return out2.reshape(x.shape)

    # Rare fallback: x.size not a multiple of 128 -> one unavoidable pad + slice.
    lane = 128
    rows = pl.cdiv(total, lane)
    flat = jnp.pad(x.reshape(-1), (0, rows * lane - total))
    x2 = flat.reshape(rows, lane)
    row_tile = _pick_row_tile(rows, lane, itemsize, budget, max_tile=1024)
    out2 = _run_dropout(x2, p, seed_arr, row_tile, False, vmem_limit)
    return out2.reshape(-1)[:total].reshape(x.shape)


if __name__ == "__main__":
    key = jax.random.PRNGKey(0)
    # "p_storage" parameter of the module: deterministic init, p = 0.3.
    p_storage = jnp.array([0.3], dtype=jnp.float32)

    # Small NCHW input consistent with a conv-style feature map.
    x = jax.random.normal(key, (2, 4, 16, 16), dtype=jnp.float32)

    # 1d dropout (per-element), training mode.
    y1 = jax.block_until_ready(
        dynamic_dropout(x, p_storage, seed=1234, dropout_dim="1d", training=True))
    # 2d dropout (per-channel), training mode (HW=256, lane-dense main path).
    y2 = jax.block_until_ready(
        dynamic_dropout(x, p_storage, seed=1234, dropout_dim="2d", training=True))
    # Eval mode is the identity (no kernel needed).
    y3 = jax.block_until_ready(
        dynamic_dropout(x, p_storage, seed=1234, dropout_dim="1d", training=False))

    assert y1.shape == x.shape and y1.dtype == x.dtype
    assert y2.shape == x.shape and y2.dtype == x.dtype
    assert bool(jnp.all(y3 == x))

    scale = 1.0 / (1.0 - float(p_storage[0]))

    # 1d: survivors are scaled by 1/(1-p); dropped elements are exactly zero.
    kept1 = y1 != 0
    assert bool(jnp.allclose(jnp.where(kept1, y1, 0.0),
                             jnp.where(kept1, x * scale, 0.0),
                             rtol=1e-5, atol=1e-5))

    # 2d: each (n, c) channel is either entirely zero or entirely scaled by 1/(1-p).
    ch_y = y2.reshape(2 * 4, -1)
    ch_x = (x * scale).reshape(2 * 4, -1)
    ch_zero = jnp.all(ch_y == 0, axis=1)
    ch_scaled = jnp.all(jnp.abs(ch_y - ch_x) <= 1e-5 + 1e-5 * jnp.abs(ch_x), axis=1)
    assert bool(jnp.all(ch_zero | ch_scaled))

    # 2d fallback path (spatial size not a multiple of 128): tiny lane-dense
    # multiplier kernel + fused XLA broadcast multiply.
    x_s = jax.random.normal(jax.random.PRNGKey(1), (2, 4, 5, 5), dtype=jnp.float32)
    y_s = jax.block_until_ready(
        dynamic_dropout(x_s, p_storage, seed=7, dropout_dim="2d", training=True))
    ch_ys = y_s.reshape(2 * 4, -1)
    ch_xs = (x_s * scale).reshape(2 * 4, -1)
    s_zero = jnp.all(ch_ys == 0, axis=1)
    s_scaled = jnp.all(jnp.abs(ch_ys - ch_xs) <= 1e-5 + 1e-5 * jnp.abs(ch_xs), axis=1)
    assert bool(jnp.all(s_zero | s_scaled))

    print("KERNEL_OK")
</pallas_src>

<mosaic_0001>
module attributes {stable_mosaic.version = 11 : i64} {
  func.func @_dropout_kernel(%arg0: i32, %arg1: memref<1xf32, #tpu.memory_space<smem>>, %arg2: memref<1xi32, #tpu.memory_space<smem>>, %arg3: memref<2x1024xf32, #tpu.memory_space<vmem>>, %arg4: memref<2x1024xf32, #tpu.memory_space<vmem>>) attributes {dimension_semantics = [#tpu.dimension_semantics<parallel>], iteration_bounds = array<i64: 1>, scalar_prefetch = 0 : i64, scratch_operands = 0 : i64, tpu.core_type = #tpu.core_type<tc>, window_params = [{transform_indices = @transform_0, window_bounds = array<i64: 1>}, {transform_indices = @transform_1, window_bounds = array<i64: 1>}, {transform_indices = @transform_2, window_bounds = array<i64: 2, 1024>}, {transform_indices = @transform_3, window_bounds = array<i64: 2, 1024>}]} {
    %c0 = arith.constant 0 : index
    %0 = memref.load %arg1[%c0] : memref<1xf32, #tpu.memory_space<smem>>
    %cst = arith.constant 0.000000e+00 : f32
    %cst_0 = arith.constant 1.000000e+00 : f32
    %1 = arith.maximumf %cst, %0 : f32
    %2 = arith.minimumf %cst_0, %1 : f32
    %cst_1 = arith.constant 0x4B800000 : f32
    %3 = arith.mulf %2, %cst_1 : f32
    %4 = arith.fptosi %3 : f32 to i32
    %cst_2 = arith.constant 1.000000e+00 : f32
    %5 = arith.cmpf olt, %2, %cst_2 : f32
    %cst_3 = arith.constant 1.000000e+00 : f32
    %6 = arith.subf %cst_3, %2 : f32
    %cst_4 = arith.constant 1.000000e+00 : f32
    %7 = arith.divf %cst_4, %6 : f32
    %cst_5 = arith.constant 0.000000e+00 : f32
    %8 = arith.select %5, %7, %cst_5 : f32
    %c0_6 = arith.constant 0 : index
    %9 = memref.load %arg2[%c0_6] : memref<1xi32, #tpu.memory_space<smem>>
    %c-1640531527_i32 = arith.constant -1640531527 : i32
    %10 = arith.muli %9, %c-1640531527_i32 : i32
    %c2_i32 = arith.constant 2 : i32
    %11 = arith.muli %arg0, %c2_i32 : i32
    %c0_7 = arith.constant 0 : index
    %c0_8 = arith.constant 0 : index
    %12 = vector.load %arg3[%c0_7, %c0_8] : memref<2x1024xf32, #tpu.memory_space<vmem>>, vector<2x1024xf32>
    %13 = tpu.iota {dimensions = array<i32: 0>} : vector<2x1024xi32>
    %c1024_i32 = arith.constant 1024 : i32
    %14 = vector.broadcast %c1024_i32 : i32 to vector<2x1024xi32>
    %15 = arith.muli %13, %14 : vector<2x1024xi32>
    %16 = tpu.iota {dimensions = array<i32: 1>} : vector<2x1024xi32>
    %17 = arith.addi %15, %16 : vector<2x1024xi32>
    %c1024_i32_9 = arith.constant 1024 : i32
    %18 = arith.muli %11, %c1024_i32_9 : i32
    %19 = vector.broadcast %18 : i32 to vector<2x1024xi32>
    %20 = arith.addi %19, %17 : vector<2x1024xi32>
    %21 = vector.broadcast %10 : i32 to vector<2x1024xi32>
    %22 = arith.xori %20, %21 : vector<2x1024xi32>
    %c16_i32 = arith.constant 16 : i32
    %23 = vector.broadcast %c16_i32 : i32 to vector<2x1024xi32>
    %24 = arith.shrsi %22, %23 : vector<2x1024xi32>
    %c65535_i32 = arith.constant 65535 : i32
    %25 = vector.broadcast %c65535_i32 : i32 to vector<2x1024xi32>
    %26 = arith.andi %24, %25 : vector<2x1024xi32>
    %27 = arith.xori %22, %26 : vector<2x1024xi32>
    %c2146121005_i32 = arith.constant 2146121005 : i32
    %28 = vector.broadcast %c2146121005_i32 : i32 to vector<2x1024xi32>
    %29 = arith.muli %27, %28 : vector<2x1024xi32>
    %c15_i32 = arith.constant 15 : i32
    %30 = vector.broadcast %c15_i32 : i32 to vector<2x1024xi32>
    %31 = arith.shrsi %29, %30 : vector<2x1024xi32>
    %c131071_i32 = arith.constant 131071 : i32
    %32 = vector.broadcast %c131071_i32 : i32 to vector<2x1024xi32>
    %33 = arith.andi %31, %32 : vector<2x1024xi32>
    %34 = arith.xori %29, %33 : vector<2x1024xi32>
    %c-2073254261_i32 = arith.constant -2073254261 : i32
    %35 = vector.broadcast %c-2073254261_i32 : i32 to vector<2x1024xi32>
    %36 = arith.muli %34, %35 : vector<2x1024xi32>
    %c16_i32_10 = arith.constant 16 : i32
    %37 = vector.broadcast %c16_i32_10 : i32 to vector<2x1024xi32>
    %38 = arith.shrsi %36, %37 : vector<2x1024xi32>
    %c65535_i32_11 = arith.constant 65535 : i32
    %39 = vector.broadcast %c65535_i32_11 : i32 to vector<2x1024xi32>
    %40 = arith.andi %38, %39 : vector<2x1024xi32>
    %41 = arith.xori %36, %40 : vector<2x1024xi32>
    %c8_i32 = arith.constant 8 : i32
    %42 = vector.broadcast %c8_i32 : i32 to vector<2x1024xi32>
    %43 = arith.shrsi %41, %42 : vector<2x1024xi32>
    %c16777215_i32 = arith.constant 16777215 : i32
    %44 = vector.broadcast %c16777215_i32 : i32 to vector<2x1024xi32>
    %45 = arith.andi %43, %44 : vector<2x1024xi32>
    %46 = vector.broadcast %4 : i32 to vector<2x1024xi32>
    %47 = arith.cmpi sge, %45, %46 : vector<2x1024xi32>
    %cst_12 = arith.constant 0.000000e+00 : f32
    %48 = vector.broadcast %8 : f32 to vector<2x1024xf32>
    %49 = vector.broadcast %cst_12 : f32 to vector<2x1024xf32>
    %50 = arith.select %47, %48, %49 : vector<2x1024xi1>, vector<2x1024xf32>
    %51 = arith.mulf %12, %50 : vector<2x1024xf32>
    %c0_13 = arith.constant 0 : index
    %c0_14 = arith.constant 0 : index
    %52 = vector.load %arg4[%c0_13, %c0_14] : memref<2x1024xf32, #tpu.memory_space<vmem>>, vector<2x1024xf32>
    tpu.vector_store %arg4[%c0_13, %c0_14], %51 {strides = array<i32>} : memref<2x1024xf32, #tpu.memory_space<vmem>>, vector<2x1024xf32>,
    return
  }
  func.func @transform_0(%arg0: i32) -> i32 {
    %c0_i32 = arith.constant 0 : i32
    %c0_i32_0 = arith.constant 0 : i32
    return %c0_i32 : i32
  }
  func.func @transform_1(%arg0: i32) -> i32 {
    %c0_i32 = arith.constant 0 : i32
    %c0_i32_0 = arith.constant 0 : i32
    return %c0_i32 : i32
  }
  func.func @transform_2(%arg0: i32) -> (i32, i32) {
    %c0_i32 = arith.constant 0 : i32
    %c0_i32_0 = arith.constant 0 : i32
    return %arg0, %c0_i32 : i32, i32
  }
  func.func @transform_3(%arg0: i32) -> (i32, i32) {
    %c0_i32 = arith.constant 0 : i32
    %c0_i32_0 = arith.constant 0 : i32
    return %arg0, %c0_i32 : i32, i32
  }
}

</mosaic_0001>

<llo_original>
// kernel: tpu_custom_call.1
$region0: #{tpu_custom_call.1}
  #allocation0 [shape = 'u32[]', space=smem, size = 0x4, offset = 0x4, fixed_abs, tag = 'smem constant byte address 0x4 - core index']
  #allocation1 [shape = 'u32[144,128]{1,0:T(1,128)}', space=vmem, size = 0x12000, scoped, tag = 'internal scratch']
  #allocation2 [shape = 'f32[1]{0:T(128)S(6)}', space=smem, size = 0x200, scoped, tag = 'scoped memory for tpu_custom_call.1']
  #allocation3 [shape = 's32[1]{0:T(128)S(6)}', space=smem, size = 0x200, scoped, tag = 'scoped memory for tpu_custom_call.1']
  %s0 = inlined_call_operand.<no memory space> [shape: f32[1], index: 0, kind: input, shape index: {}]
  %s1 = inlined_call_operand.<no memory space> [shape: s32[1], index: 1, kind: input, shape index: {}]
  %s2 = inlined_call_operand.hbm [shape: f32[2,1024], index: 2, kind: input, shape index: {}]
  %s3 = inlined_call_operand.hbm [shape: f32[2,1024], index: 3, kind: output, shape index: {}]
  %s4 = sld [smem:[#allocation0]]
  $region26: #{tpu_custom_call.1} parent=0
    _
  %s6 = ssub.s32 1, %s4
  %s7 = scalar_select 0, %s6, %s4
  %8 = sst [smem:[#allocation2]] %s0
  %9 = sst [smem:[#allocation3]] %s1
  $region1: #{tpu_custom_call.1} parent=0
    #allocation4 [shape = 'u8[8192]{0}', space=vmem, size = 0x2000, scoped, tag = 'input window, operand 2, single buffered']
    #allocation5 [shape = 's32[1]{0}', space=sflag, size = 0x4, scoped, tag = 'scoped memory for tpu_custom_call.1']
    #allocation6 [shape = 's32[1]{0}', space=sflag, size = 0x4, scoped, tag = 'scoped memory for tpu_custom_call.1']
    #allocation7 [shape = 'u8[8192]{0}', space=vmem, size = 0x2000, scoped, tag = 'output window, operand 0, single buffered']
    %10 = vsyncpa [#allocation5], 0
    %11 = vsyncpa [#allocation6], 0
    // Predicated region
    $region2: #{tpu_custom_call.1} parent=1 // pred_check
      _
    $region3: #{tpu_custom_call.1} parent=1 // pred_check_branch
      %13 = sbr.rel (0) target = $region5
    $region4: #{tpu_custom_call.1} parent=1 // pred_region
      _
    $region5: #{tpu_custom_call.1} parent=1 // pred_fallthru
      _
    // Predicated region
    $region6: #{tpu_custom_call.1} parent=1 // pred_check
      _
    $region7: #{tpu_custom_call.1} parent=1 // pred_check_branch
      %15 = sbr.rel (0) target = $region9
    $region8: #{tpu_custom_call.1} parent=1 // pred_region
      _
    $region9: #{tpu_custom_call.1} parent=1 // pred_fallthru
      _
    // Predicated region
    $region10: #{tpu_custom_call.1} parent=1 // pred_check
      _
    $region11: #{tpu_custom_call.1} parent=1 // pred_check_branch
      %17 = sbr.rel (0) target = $region13
    $region12: #{tpu_custom_call.1} parent=1 // pred_region
      %s19 = ssub.s32 256, 256
      %20 = vsyncadd [#allocation5], %s19
      %s22 = sshll.u32 [#allocation4], 4
      %s23 = int_to_ptr.vmem [resolvable:$true] %s22
      %25 = dma.hbm_to_vmem [thread:$0]  %s2, 256, %s23, [#allocation5]
    $region13: #{tpu_custom_call.1} parent=1 // pred_fallthru
      _
    // Predicated region
    $region14: #{tpu_custom_call.1} parent=1 // pred_check
      _
    $region15: #{tpu_custom_call.1} parent=1 // pred_check_branch
      %27 = sbr.rel (0) target = $region17
    $region16: #{tpu_custom_call.1} parent=1 // pred_region
      %28 = dma.done [#allocation5], 256
    $region17: #{tpu_custom_call.1} parent=1 // pred_fallthru
      _
    %s29 = sld [smem:[#allocation2]]
    %s30 = smax.f32 %s29, 0.0
    %s31 = smin.f32 %s30, 1.0
    %s32 = smul.f32 %s31, 16777216.0
    %s33 = scvt.f32.s32.to.zero.pseudo %s32
    %p34 = scmp.lt.f32.partialorder %s31, 1.0
    %s35 = ssub.f32 1.0, %s31
    %v36 = vstv %s35
    %v37 = vrcp.pop %v36
    %s38 = vtos %v37
    %s39 = scalar_select %p34, %s38, 0.0
    %s40 = sld [smem:[#allocation3]]
    %s41 = smul.u32 %s40, 2654435769
    %v42 = vld [vmem:[#allocation4] sm:$0xff]
    %v43 = vld [vmem:[#allocation4 + $0x8] sm:$0xff]
    %v44 = vlaneseq
    %v45 = vshrl.u32 %v44, 7
    %v46 = vmul.u32 %v45, 1024
    %v47 = vlaneseq
    %v48 = vand.u32 %v47, 127
    %v49 = vadd.s32 %v48, 128
    %v50 = vadd.s32 %v48, 256
    %v51 = vadd.s32 %v48, 384
    %v52 = vadd.s32 %v48, 512
    %v53 = vadd.s32 %v48, 640
    %v54 = vadd.s32 %v48, 768
    %v55 = vadd.s32 %v48, 896
    %v56 = vadd.s32 %v46, %v48
    %v57 = vadd.s32 %v46, %v49
    %v58 = vadd.s32 %v46, %v50
    %v59 = vadd.s32 %v46, %v51
    %v60 = vadd.s32 %v46, %v52
    %v61 = vadd.s32 %v46, %v53
    %v62 = vadd.s32 %v46, %v54
    %v63 = vadd.s32 %v46, %v55
    %s64 = smul.u32 0, 2048
    %v65 = vstv %s64
    %v66 = vadd.s32 %v65, %v56
    %v67 = vadd.s32 %v65, %v57
    %v68 = vadd.s32 %v65, %v58
    %v69 = vadd.s32 %v65, %v59
    %v70 = vadd.s32 %v65, %v60
    %v71 = vadd.s32 %v65, %v61
    %v72 = vadd.s32 %v65, %v62
    %v73 = vadd.s32 %v65, %v63
    %v74 = vstv %s41
    %v75 = vxor.u32 %v66, %v74
    %v76 = vxor.u32 %v67, %v74
    %v77 = vxor.u32 %v68, %v74
    %v78 = vxor.u32 %v69, %v74
    %v79 = vxor.u32 %v70, %v74
    %v80 = vxor.u32 %v71, %v74
    %v81 = vxor.u32 %v72, %v74
    %v82 = vxor.u32 %v73, %v74
    %v83 = vshra.s32 %v75, 16
    %v84 = vshra.s32 %v76, 16
    %v85 = vshra.s32 %v77, 16
    %v86 = vshra.s32 %v78, 16
    %v87 = vshra.s32 %v79, 16
    %v88 = vshra.s32 %v80, 16
    %v89 = vshra.s32 %v81, 16
    %v90 = vshra.s32 %v82, 16
    %v91 = vand.u32 %v83, 65535
    %v92 = vand.u32 %v84, 65535
    %v93 = vand.u32 %v85, 65535
    %v94 = vand.u32 %v86, 65535
    %v95 = vand.u32 %v87, 65535
    %v96 = vand.u32 %v88, 65535
    %v97 = vand.u32 %v89, 65535
    %v98 = vand.u32 %v90, 65535
    %v99 = vxor.u32 %v75, %v91
    %v100 = vxor.u32 %v76, %v92
    %v101 = vxor.u32 %v77, %v93
    %v102 = vxor.u32 %v78, %v94
    %v103 = vxor.u32 %v79, %v95
    %v104 = vxor.u32 %v80, %v96
    %v105 = vxor.u32 %v81, %v97
    %v106 = vxor.u32 %v82, %v98
    %v107 = vmul.u32 %v99, 2146121005
    %v108 = vmul.u32 %v100, 2146121005
    %v109 = vmul.u32 %v101, 2146121005
    %v110 = vmul.u32 %v102, 2146121005
    %v111 = vmul.u32 %v103, 2146121005
    %v112 = vmul.u32 %v104, 2146121005
    %v113 = vmul.u32 %v105, 2146121005
    %v114 = vmul.u32 %v106, 2146121005
    %v115 = vshra.s32 %v107, 15
    %v116 = vshra.s32 %v108, 15
    %v117 = vshra.s32 %v109, 15
    %v118 = vshra.s32 %v110, 15
    %v119 = vshra.s32 %v111, 15
    %v120 = vshra.s32 %v112, 15
    %v121 = vshra.s32 %v113, 15
    %v122 = vshra.s32 %v114, 15
    %v123 = vand.u32 %v115, 131071
    %v124 = vand.u32 %v116, 131071
    %v125 = vand.u32 %v117, 131071
    %v126 = vand.u32 %v118, 131071
    %v127 = vand.u32 %v119, 131071
    %v128 = vand.u32 %v120, 131071
    %v129 = vand.u32 %v121, 131071
    %v130 = vand.u32 %v122, 131071
    %v131 = vxor.u32 %v107, %v123
    %v132 = vxor.u32 %v108, %v124
    %v133 = vxor.u32 %v109, %v125
    %v134 = vxor.u32 %v110, %v126
    %v135 = vxor.u32 %v111, %v127
    %v136 = vxor.u32 %v112, %v128
    %v137 = vxor.u32 %v113, %v129
    %v138 = vxor.u32 %v114, %v130
    %v139 = vmul.u32 %v131, 2221713035
    %v140 = vmul.u32 %v132, 2221713035
    %v141 = vmul.u32 %v133, 2221713035
    %v142 = vmul.u32 %v134, 2221713035
    %v143 = vmul.u32 %v135, 2221713035
    %v144 = vmul.u32 %v136, 2221713035
    %v145 = vmul.u32 %v137, 2221713035
    %v146 = vmul.u32 %v138, 2221713035
    %v147 = vshra.s32 %v139, 16
    %v148 = vshra.s32 %v140, 16
    %v149 = vshra.s32 %v141, 16
    %v150 = vshra.s32 %v142, 16
    %v151 = vshra.s32 %v143, 16
    %v152 = vshra.s32 %v144, 16
    %v153 = vshra.s32 %v145, 16
    %v154 = vshra.s32 %v146, 16
    %v155 = vand.u32 %v147, 65535
    %v156 = vand.u32 %v148, 65535
    %v157 = vand.u32 %v149, 65535
    %v158 = vand.u32 %v150, 65535
    %v159 = vand.u32 %v151, 65535
    %v160 = vand.u32 %v152, 65535
    %v161 = vand.u32 %v153, 65535
    %v162 = vand.u32 %v154, 65535
    %v163 = vxor.u32 %v139, %v155
    %v164 = vxor.u32 %v140, %v156
    %v165 = vxor.u32 %v141, %v157
    %v166 = vxor.u32 %v142, %v158
    %v167 = vxor.u32 %v143, %v159
    %v168 = vxor.u32 %v144, %v160
    %v169 = vxor.u32 %v145, %v161
    %v170 = vxor.u32 %v146, %v162
    %v171 = vshra.s32 %v163, 8
    %v172 = vshra.s32 %v164, 8
    %v173 = vshra.s32 %v165, 8
    %v174 = vshra.s32 %v166, 8
    %v175 = vshra.s32 %v167, 8
    %v176 = vshra.s32 %v168, 8
    %v177 = vshra.s32 %v169, 8
    %v178 = vshra.s32 %v170, 8
    %v179 = vand.u32 %v171, 16777215
    %v180 = vand.u32 %v172, 16777215
    %v181 = vand.u32 %v173, 16777215
    %v182 = vand.u32 %v174, 16777215
    %v183 = vand.u32 %v175, 16777215
    %v184 = vand.u32 %v176, 16777215
    %v185 = vand.u32 %v177, 16777215
    %v186 = vand.u32 %v178, 16777215
    %v187 = vstv %s33
    %vm188 = vcmp.ge.s32.totalorder %v179, %v187
    %vm189 = vcmp.ge.s32.totalorder %v180, %v187
    %vm190 = vcmp.ge.s32.totalorder %v181, %v187
    %vm191 = vcmp.ge.s32.totalorder %v182, %v187
    %vm192 = vcmp.ge.s32.totalorder %v183, %v187
    %vm193 = vcmp.ge.s32.totalorder %v184, %v187
    %vm194 = vcmp.ge.s32.totalorder %v185, %v187
    %vm195 = vcmp.ge.s32.totalorder %v186, %v187
    %v196 = vstv %s39
    %v197 = vsel %vm188, %v196, 0.0
    %v198 = vsel %vm189, %v196, 0.0
    %v199 = vsel %vm190, %v196, 0.0
    %v200 = vsel %vm191, %v196, 0.0
    %v201 = vsel %vm192, %v196, 0.0
    %v202 = vsel %vm193, %v196, 0.0
    %v203 = vsel %vm194, %v196, 0.0
    %v204 = vsel %vm195, %v196, 0.0
    %v213 = vcombine.low %v197, %v198
    %v214 = vcombine.low %v199, %v200
    %v216 = vunpack.c.l.s4 1983009808
    %v217 = vunpack.c.0.s8 %v216
    %v218 = vlaneseq
    %v219 = vshrl.u32 %v218, 7
    %v220 = vsub.s32 %v217, %v219
    %v221 = vrot.slane %v213, %v220
    %v223 = vunpack.c.l.s4 1983009808
    %v224 = vunpack.c.0.s8 %v223
    %v225 = vlaneseq
    %v226 = vshrl.u32 %v225, 7
    %v227 = vsub.s32 %v224, %v226
    %v228 = vrot.slane %v214, %v227
    %v229 = vcombine.low %v221, %v228
    %v230 = vcombine.low %v201, %v202
    %v231 = vcombine.low %v203, %v204
    %v233 = vunpack.c.l.s4 1983009808
    %v234 = vunpack.c.0.s8 %v233
    %v235 = vlaneseq
    %v236 = vshrl.u32 %v235, 7
    %v237 = vsub.s32 %v234, %v236
    %v238 = vrot.slane %v230, %v237
    %v240 = vunpack.c.l.s4 1983009808
    %v241 = vunpack.c.0.s8 %v240
    %v242 = vlaneseq
    %v243 = vshrl.u32 %v242, 7
    %v244 = vsub.s32 %v241, %v243
    %v245 = vrot.slane %v231, %v244
    %v246 = vcombine.low %v238, %v245
    %v249 = vmul.f32 %v42, %v229
    %v250 = vmul.f32 %v43, %v246
    %251 = vst [vmem:[#allocation7] sm:$0xff] %v249
    %252 = vst [vmem:[#allocation7 + $0x8] sm:$0xff] %v250
    // Predicated region
    $region18: #{tpu_custom_call.1} parent=1 // pred_check
      _
    $region19: #{tpu_custom_call.1} parent=1 // pred_check_branch
      %254 = sbr.rel (0) target = $region21
    $region20: #{tpu_custom_call.1} parent=1 // pred_region
      %s256 = ssub.s32 256, 256
      %257 = vsyncadd [#allocation6], %s256
      %s259 = sshll.u32 [#allocation7], 4
      %s260 = int_to_ptr.vmem [resolvable:$true] %s259
      %262 = dma.vmem_to_hbm [thread:$0]  %s260, 256, %s3, [#allocation6]
    $region21: #{tpu_custom_call.1} parent=1 // pred_fallthru
      _
    // Predicated region
    $region22: #{tpu_custom_call.1} parent=1 // pred_check
      _
    $region23: #{tpu_custom_call.1} parent=1 // pred_check_branch
      %264 = sbr.rel (0) target = $region25
    $region24: #{tpu_custom_call.1} parent=1 // pred_region
      %265 = dma.done [#allocation6], 256
    $region25: #{tpu_custom_call.1} parent=1 // pred_fallthru
      _
    %266 = vsyncpa [#allocation5], 1
    %267 = vsyncpa [#allocation6], 1

</llo_original>
